<compile_context>
chip_gen: v5e
topology: v5e:2x2
jax: 0.10.0
libtpu: 0.0.40
codegen_flags: <defaults>
</compile_context>

<pallas_src>
import jax
import jax.numpy as jnp
from jax.experimental import pallas as pl
from jax.experimental.pallas import tpu as pltpu


# ----------------------------- Pallas forward ------------------------------ #
def rnn_classifier_forward(text, lengths, params):
    """text: (B, T) int32 token ids; lengths: (B,) int32 (sorted descending)."""
    emb = params["embedding"]                     # (V, E) frozen
    B, T = text.shape
    E = emb.shape[1]
    H = params["wh3"].shape[0]
    G = 3 * H
    O = params["wfc"].shape[1]

    # Embedding lookup (glue: pure gather stays in XLA), time-major flatten:
    # row t*B + b holds the embedding of token (b, t).
    x = jnp.take(emb, text, axis=0)               # (B, T, E)
    x = jnp.transpose(x, (1, 0, 2)).reshape(T * B, E)
    len2d = lengths.astype(jnp.int32).reshape(B, 1)

    def kernel(x_ref, len_ref, wi_ref, wh_ref, bi_ref, bh_ref,
               wfc_ref, bfc_ref, out_ref):
        # Hoisted input projection for ALL time steps: one (T*B,E)@(E,3H) matmul.
        gx_all = (jnp.dot(x_ref[...], wi_ref[...],
                          preferred_element_type=jnp.float32)
                  + bi_ref[...])                              # (T*B, 3H)
        wh = wh_ref[...]                                      # (H, 3H)
        bh = bh_ref[...]                                      # (1, 3H) = [0|0|b_hn]
        lens = len_ref[...]                                   # (B, 1) int32

        h = jnp.zeros((B, H), jnp.float32)
        # Fully unrolled recurrence (T small & static). Only the small
        # h @ (H,3H) matmul + elementwise gates remain on the serial path.
        for t in range(T):
            gx = gx_all[t * B:(t + 1) * B, :]                 # (B, 3H), sublane-aligned
            gh = jnp.dot(h, wh, preferred_element_type=jnp.float32) + bh
            r = jax.nn.sigmoid(gx[:, 0:H] + gh[:, 0:H])
            z = jax.nn.sigmoid(gx[:, H:2 * H] + gh[:, H:2 * H])
            n = jnp.tanh(gx[:, 2 * H:] + r * gh[:, 2 * H:])
            h_new = (1.0 - z) * n + z * h
            # pack_padded_sequence: only rows whose sequence is still active update.
            h = jnp.where(t < lens, h_new, h)

        out_ref[...] = (jnp.dot(h, wfc_ref[...],
                                preferred_element_type=jnp.float32)
                        + bfc_ref[...])

    vmem = pl.BlockSpec(memory_space=pltpu.MemorySpace.VMEM)
    return pl.pallas_call(
        kernel,
        out_shape=jax.ShapeDtypeStruct((B, O), jnp.float32),
        in_specs=[vmem] * 8,
        out_specs=vmem,
    )(x, len2d,
      params["wi3"], params["wh3"], params["bi3"], params["bh3"],
      params["wfc"], params["bfc"])


# ----------------------- weight prep (PyTorch layout -> kernel layout) ------ #
def prepare_params(raw):
    """raw uses PyTorch GRU layout: w_ih (3H,E), w_hh (3H,H), b_ih/b_hh (3H,),
    w_fc (O,H), b_fc (O,), gates ordered [r | z | n]."""
    H = raw["w_hh"].shape[1]
    b_ih, b_hh = raw["b_ih"], raw["b_hh"]
    bi3 = jnp.concatenate([b_ih[:2 * H] + b_hh[:2 * H], b_ih[2 * H:]]).reshape(1, 3 * H)
    bh3 = jnp.concatenate([jnp.zeros((2 * H,), jnp.float32), b_hh[2 * H:]]).reshape(1, 3 * H)
    return {
        "embedding": raw["embedding"],
        "wi3": raw["w_ih"].T,                  # (E, 3H)  -> x @ wi3
        "wh3": raw["w_hh"].T,                  # (H, 3H)  -> h @ wh3
        "bi3": bi3,                            # (1, 3H) = [b_ir+b_hr | b_iz+b_hz | b_in]
        "bh3": bh3,                            # (1, 3H) = [0 | 0 | b_hn]
        "wfc": raw["w_fc"].T,                  # (H, O)
        "bfc": raw["b_fc"].reshape(1, -1),     # (1, O)
    }


# --------------------------- pure-JAX reference ---------------------------- #
def rnn_classifier_ref(text, lengths, raw):
    emb = raw["embedding"]
    x = jnp.take(emb, text, axis=0)               # (B, T, E)
    B, T, _ = x.shape
    H = raw["w_hh"].shape[1]
    w_ih, w_hh, b_ih, b_hh = raw["w_ih"], raw["w_hh"], raw["b_ih"], raw["b_hh"]
    Wir, Wiz, Win = w_ih[:H], w_ih[H:2 * H], w_ih[2 * H:]
    Whr, Whz, Whn = w_hh[:H], w_hh[H:2 * H], w_hh[2 * H:]
    bir, biz, bin_ = b_ih[:H], b_ih[H:2 * H], b_ih[2 * H:]
    bhr, bhz, bhn = b_hh[:H], b_hh[H:2 * H], b_hh[2 * H:]
    h = jnp.zeros((B, H), jnp.float32)
    for t in range(T):
        xt = x[:, t]
        r = jax.nn.sigmoid(xt @ Wir.T + bir + h @ Whr.T + bhr)
        z = jax.nn.sigmoid(xt @ Wiz.T + biz + h @ Whz.T + bhz)
        n = jnp.tanh(xt @ Win.T + bin_ + r * (h @ Whn.T + bhn))
        h_new = (1.0 - z) * n + z * h
        h = jnp.where((t < lengths)[:, None], h_new, h)
    return h @ raw["w_fc"].T + raw["b_fc"]


# --------------------------------- main ------------------------------------ #
if __name__ == "__main__":
    V, E, H, O = 50, 32, 32, 4        # vocab, embed_dim, hidden_dim, output_dim
    B, T = 8, 8                       # batch, (padded) seq length

    key = jax.random.PRNGKey(0)
    ks = jax.random.split(key, 9)

    def init(k, shape, scale=0.1):
        return (scale * jax.random.normal(k, shape)).astype(jnp.float32)

    raw = {
        "embedding": init(ks[0], (V, E), 1.0),
        "w_ih": init(ks[1], (3 * H, E)),   # PyTorch GRU weight_ih_l0 layout [r|z|n]
        "w_hh": init(ks[2], (3 * H, H)),   # PyTorch GRU weight_hh_l0 layout [r|z|n]
        "b_ih": init(ks[3], (3 * H,)),
        "b_hh": init(ks[4], (3 * H,)),
        "w_fc": init(ks[5], (O, H)),
        "b_fc": init(ks[6], (O,)),
    }

    text = jax.random.randint(ks[7], (B, T), 0, V, dtype=jnp.int32)
    # enforce_sorted=True -> lengths sorted descending, each >= 1
    lengths = jnp.array([8, 8, 7, 6, 5, 4, 3, 1], dtype=jnp.int32)

    params = prepare_params(raw)
    out = jax.block_until_ready(rnn_classifier_forward(text, lengths, params))
    ref = rnn_classifier_ref(text, lengths, raw)

    assert out.shape == (B, O)
    assert jnp.allclose(out, ref, atol=1e-3, rtol=1e-3), (out, ref)

    print("KERNEL_OK")
</pallas_src>

<mosaic_0001>
module attributes {stable_mosaic.version = 11 : i64} {
  func.func @kernel(%arg0: memref<64x32xf32, #tpu.memory_space<vmem>>, %arg1: memref<8x1xi32, #tpu.memory_space<vmem>>, %arg2: memref<32x96xf32, #tpu.memory_space<vmem>>, %arg3: memref<32x96xf32, #tpu.memory_space<vmem>>, %arg4: memref<1x96xf32, #tpu.memory_space<vmem>>, %arg5: memref<1x96xf32, #tpu.memory_space<vmem>>, %arg6: memref<32x4xf32, #tpu.memory_space<vmem>>, %arg7: memref<1x4xf32, #tpu.memory_space<vmem>>, %arg8: memref<8x4xf32, #tpu.memory_space<vmem>>) attributes {dimension_semantics = [], scalar_prefetch = 0 : i64, scratch_operands = 0 : i64, tpu.core_type = #tpu.core_type<tc>} {
    %c0 = arith.constant 0 : index
    %c0_0 = arith.constant 0 : index
    %0 = vector.load %arg0[%c0, %c0_0] : memref<64x32xf32, #tpu.memory_space<vmem>>, vector<64x32xf32>
    %c0_1 = arith.constant 0 : index
    %c0_2 = arith.constant 0 : index
    %1 = vector.load %arg2[%c0_1, %c0_2] : memref<32x96xf32, #tpu.memory_space<vmem>>, vector<32x96xf32>
    %cst = arith.constant dense<0.000000e+00> : vector<64x96xf32>
    %2 = tpu.matmul %0, %1, %cst {dimension_numbers = #tpu.dot_dimension_numbers<[1], [0], [0], [1], [0, 0, 1, 1], [], []>} : vector<64x32xf32>, vector<32x96xf32>, vector<64x96xf32> -> vector<64x96xf32>
    %c0_3 = arith.constant 0 : index
    %c0_4 = arith.constant 0 : index
    %3 = vector.load %arg4[%c0_3, %c0_4] : memref<1x96xf32, #tpu.memory_space<vmem>>, vector<1x96xf32>
    %4 = vector.broadcast %3 : vector<1x96xf32> to vector<64x96xf32>
    %5 = arith.addf %2, %4 : vector<64x96xf32>
    %c0_5 = arith.constant 0 : index
    %c0_6 = arith.constant 0 : index
    %6 = vector.load %arg3[%c0_5, %c0_6] : memref<32x96xf32, #tpu.memory_space<vmem>>, vector<32x96xf32>
    %c0_7 = arith.constant 0 : index
    %c0_8 = arith.constant 0 : index
    %7 = vector.load %arg5[%c0_7, %c0_8] : memref<1x96xf32, #tpu.memory_space<vmem>>, vector<1x96xf32>
    %c0_9 = arith.constant 0 : index
    %c0_10 = arith.constant 0 : index
    %8 = vector.load %arg1[%c0_9, %c0_10] : memref<8x1xi32, #tpu.memory_space<vmem>>, vector<8x1xi32>
    %cst_11 = arith.constant 0.000000e+00 : f32
    %9 = vector.broadcast %cst_11 : f32 to vector<8x32xf32>
    %10 = vector.extract_strided_slice %5 {offsets = [0, 0], sizes = [8, 96], strides = [1, 1]} : vector<64x96xf32> to vector<8x96xf32>
    %cst_12 = arith.constant dense<0.000000e+00> : vector<8x96xf32>
    %11 = tpu.matmul %9, %6, %cst_12 {dimension_numbers = #tpu.dot_dimension_numbers<[1], [0], [0], [1], [0, 0, 1, 1], [], []>} : vector<8x32xf32>, vector<32x96xf32>, vector<8x96xf32> -> vector<8x96xf32>
    %12 = vector.broadcast %7 : vector<1x96xf32> to vector<8x96xf32>
    %13 = arith.addf %11, %12 : vector<8x96xf32>
    %14 = vector.extract_strided_slice %10 {offsets = [0, 0], sizes = [8, 32], strides = [1, 1]} : vector<8x96xf32> to vector<8x32xf32>
    %15 = vector.extract_strided_slice %13 {offsets = [0, 0], sizes = [8, 32], strides = [1, 1]} : vector<8x96xf32> to vector<8x32xf32>
    %16 = arith.addf %14, %15 : vector<8x32xf32>
    %17 = arith.negf %16 : vector<8x32xf32>
    %18 = math.exp %17 : vector<8x32xf32>
    %cst_13 = arith.constant 1.000000e+00 : f32
    %19 = vector.broadcast %cst_13 : f32 to vector<8x32xf32>
    %20 = arith.addf %19, %18 : vector<8x32xf32>
    %21 = arith.divf %19, %20 : vector<8x32xf32>
    %22 = vector.extract_strided_slice %10 {offsets = [0, 32], sizes = [8, 32], strides = [1, 1]} : vector<8x96xf32> to vector<8x32xf32>
    %23 = vector.extract_strided_slice %13 {offsets = [0, 32], sizes = [8, 32], strides = [1, 1]} : vector<8x96xf32> to vector<8x32xf32>
    %24 = arith.addf %22, %23 : vector<8x32xf32>
    %25 = arith.negf %24 : vector<8x32xf32>
    %26 = math.exp %25 : vector<8x32xf32>
    %cst_14 = arith.constant 1.000000e+00 : f32
    %27 = vector.broadcast %cst_14 : f32 to vector<8x32xf32>
    %28 = arith.addf %27, %26 : vector<8x32xf32>
    %29 = arith.divf %27, %28 : vector<8x32xf32>
    %30 = vector.extract_strided_slice %10 {offsets = [0, 64], sizes = [8, 32], strides = [1, 1]} : vector<8x96xf32> to vector<8x32xf32>
    %31 = vector.extract_strided_slice %13 {offsets = [0, 64], sizes = [8, 32], strides = [1, 1]} : vector<8x96xf32> to vector<8x32xf32>
    %32 = arith.mulf %21, %31 : vector<8x32xf32>
    %33 = arith.addf %30, %32 : vector<8x32xf32>
    %34 = math.tanh %33 : vector<8x32xf32>
    %cst_15 = arith.constant 1.000000e+00 : f32
    %35 = vector.broadcast %cst_15 : f32 to vector<8x32xf32>
    %36 = arith.subf %35, %29 : vector<8x32xf32>
    %37 = arith.mulf %36, %34 : vector<8x32xf32>
    %38 = arith.mulf %29, %9 : vector<8x32xf32>
    %39 = arith.addf %37, %38 : vector<8x32xf32>
    %c0_i32 = arith.constant 0 : i32
    %40 = vector.broadcast %c0_i32 : i32 to vector<8x1xi32>
    %41 = arith.cmpi sgt, %8, %40 : vector<8x1xi32>
    %42 = vector.shape_cast %41 : vector<8x1xi1> to vector<8x1xi1>
    %43 = vector.broadcast %42 : vector<8x1xi1> to vector<8x32xi1>
    %44 = arith.select %43, %39, %9 : vector<8x32xi1>, vector<8x32xf32>
    %45 = vector.extract_strided_slice %5 {offsets = [8, 0], sizes = [8, 96], strides = [1, 1]} : vector<64x96xf32> to vector<8x96xf32>
    %cst_16 = arith.constant dense<0.000000e+00> : vector<8x96xf32>
    %46 = tpu.matmul %44, %6, %cst_16 {dimension_numbers = #tpu.dot_dimension_numbers<[1], [0], [0], [1], [0, 0, 1, 1], [], []>} : vector<8x32xf32>, vector<32x96xf32>, vector<8x96xf32> -> vector<8x96xf32>
    %47 = vector.broadcast %7 : vector<1x96xf32> to vector<8x96xf32>
    %48 = arith.addf %46, %47 : vector<8x96xf32>
    %49 = vector.extract_strided_slice %45 {offsets = [0, 0], sizes = [8, 32], strides = [1, 1]} : vector<8x96xf32> to vector<8x32xf32>
    %50 = vector.extract_strided_slice %48 {offsets = [0, 0], sizes = [8, 32], strides = [1, 1]} : vector<8x96xf32> to vector<8x32xf32>
    %51 = arith.addf %49, %50 : vector<8x32xf32>
    %52 = arith.negf %51 : vector<8x32xf32>
    %53 = math.exp %52 : vector<8x32xf32>
    %cst_17 = arith.constant 1.000000e+00 : f32
    %54 = vector.broadcast %cst_17 : f32 to vector<8x32xf32>
    %55 = arith.addf %54, %53 : vector<8x32xf32>
    %56 = arith.divf %54, %55 : vector<8x32xf32>
    %57 = vector.extract_strided_slice %45 {offsets = [0, 32], sizes = [8, 32], strides = [1, 1]} : vector<8x96xf32> to vector<8x32xf32>
    %58 = vector.extract_strided_slice %48 {offsets = [0, 32], sizes = [8, 32], strides = [1, 1]} : vector<8x96xf32> to vector<8x32xf32>
    %59 = arith.addf %57, %58 : vector<8x32xf32>
    %60 = arith.negf %59 : vector<8x32xf32>
    %61 = math.exp %60 : vector<8x32xf32>
    %cst_18 = arith.constant 1.000000e+00 : f32
    %62 = vector.broadcast %cst_18 : f32 to vector<8x32xf32>
    %63 = arith.addf %62, %61 : vector<8x32xf32>
    %64 = arith.divf %62, %63 : vector<8x32xf32>
    %65 = vector.extract_strided_slice %45 {offsets = [0, 64], sizes = [8, 32], strides = [1, 1]} : vector<8x96xf32> to vector<8x32xf32>
    %66 = vector.extract_strided_slice %48 {offsets = [0, 64], sizes = [8, 32], strides = [1, 1]} : vector<8x96xf32> to vector<8x32xf32>
    %67 = arith.mulf %56, %66 : vector<8x32xf32>
    %68 = arith.addf %65, %67 : vector<8x32xf32>
    %69 = math.tanh %68 : vector<8x32xf32>
    %cst_19 = arith.constant 1.000000e+00 : f32
    %70 = vector.broadcast %cst_19 : f32 to vector<8x32xf32>
    %71 = arith.subf %70, %64 : vector<8x32xf32>
    %72 = arith.mulf %71, %69 : vector<8x32xf32>
    %73 = arith.mulf %64, %44 : vector<8x32xf32>
    %74 = arith.addf %72, %73 : vector<8x32xf32>
    %c1_i32 = arith.constant 1 : i32
    %75 = vector.broadcast %c1_i32 : i32 to vector<8x1xi32>
    %76 = arith.cmpi sgt, %8, %75 : vector<8x1xi32>
    %77 = vector.shape_cast %76 : vector<8x1xi1> to vector<8x1xi1>
    %78 = vector.broadcast %77 : vector<8x1xi1> to vector<8x32xi1>
    %79 = arith.select %78, %74, %44 : vector<8x32xi1>, vector<8x32xf32>
    %80 = vector.extract_strided_slice %5 {offsets = [16, 0], sizes = [8, 96], strides = [1, 1]} : vector<64x96xf32> to vector<8x96xf32>
    %cst_20 = arith.constant dense<0.000000e+00> : vector<8x96xf32>
    %81 = tpu.matmul %79, %6, %cst_20 {dimension_numbers = #tpu.dot_dimension_numbers<[1], [0], [0], [1], [0, 0, 1, 1], [], []>} : vector<8x32xf32>, vector<32x96xf32>, vector<8x96xf32> -> vector<8x96xf32>
    %82 = vector.broadcast %7 : vector<1x96xf32> to vector<8x96xf32>
    %83 = arith.addf %81, %82 : vector<8x96xf32>
    %84 = vector.extract_strided_slice %80 {offsets = [0, 0], sizes = [8, 32], strides = [1, 1]} : vector<8x96xf32> to vector<8x32xf32>
    %85 = vector.extract_strided_slice %83 {offsets = [0, 0], sizes = [8, 32], strides = [1, 1]} : vector<8x96xf32> to vector<8x32xf32>
    %86 = arith.addf %84, %85 : vector<8x32xf32>
    %87 = arith.negf %86 : vector<8x32xf32>
    %88 = math.exp %87 : vector<8x32xf32>
    %cst_21 = arith.constant 1.000000e+00 : f32
    %89 = vector.broadcast %cst_21 : f32 to vector<8x32xf32>
    %90 = arith.addf %89, %88 : vector<8x32xf32>
    %91 = arith.divf %89, %90 : vector<8x32xf32>
    %92 = vector.extract_strided_slice %80 {offsets = [0, 32], sizes = [8, 32], strides = [1, 1]} : vector<8x96xf32> to vector<8x32xf32>
    %93 = vector.extract_strided_slice %83 {offsets = [0, 32], sizes = [8, 32], strides = [1, 1]} : vector<8x96xf32> to vector<8x32xf32>
    %94 = arith.addf %92, %93 : vector<8x32xf32>
    %95 = arith.negf %94 : vector<8x32xf32>
    %96 = math.exp %95 : vector<8x32xf32>
    %cst_22 = arith.constant 1.000000e+00 : f32
    %97 = vector.broadcast %cst_22 : f32 to vector<8x32xf32>
    %98 = arith.addf %97, %96 : vector<8x32xf32>
    %99 = arith.divf %97, %98 : vector<8x32xf32>
    %100 = vector.extract_strided_slice %80 {offsets = [0, 64], sizes = [8, 32], strides = [1, 1]} : vector<8x96xf32> to vector<8x32xf32>
    %101 = vector.extract_strided_slice %83 {offsets = [0, 64], sizes = [8, 32], strides = [1, 1]} : vector<8x96xf32> to vector<8x32xf32>
    %102 = arith.mulf %91, %101 : vector<8x32xf32>
    %103 = arith.addf %100, %102 : vector<8x32xf32>
    %104 = math.tanh %103 : vector<8x32xf32>
    %cst_23 = arith.constant 1.000000e+00 : f32
    %105 = vector.broadcast %cst_23 : f32 to vector<8x32xf32>
    %106 = arith.subf %105, %99 : vector<8x32xf32>
    %107 = arith.mulf %106, %104 : vector<8x32xf32>
    %108 = arith.mulf %99, %79 : vector<8x32xf32>
    %109 = arith.addf %107, %108 : vector<8x32xf32>
    %c2_i32 = arith.constant 2 : i32
    %110 = vector.broadcast %c2_i32 : i32 to vector<8x1xi32>
    %111 = arith.cmpi sgt, %8, %110 : vector<8x1xi32>
    %112 = vector.shape_cast %111 : vector<8x1xi1> to vector<8x1xi1>
    %113 = vector.broadcast %112 : vector<8x1xi1> to vector<8x32xi1>
    %114 = arith.select %113, %109, %79 : vector<8x32xi1>, vector<8x32xf32>
    %115 = vector.extract_strided_slice %5 {offsets = [24, 0], sizes = [8, 96], strides = [1, 1]} : vector<64x96xf32> to vector<8x96xf32>
    %cst_24 = arith.constant dense<0.000000e+00> : vector<8x96xf32>
    %116 = tpu.matmul %114, %6, %cst_24 {dimension_numbers = #tpu.dot_dimension_numbers<[1], [0], [0], [1], [0, 0, 1, 1], [], []>} : vector<8x32xf32>, vector<32x96xf32>, vector<8x96xf32> -> vector<8x96xf32>
    %117 = vector.broadcast %7 : vector<1x96xf32> to vector<8x96xf32>
    %118 = arith.addf %116, %117 : vector<8x96xf32>
    %119 = vector.extract_strided_slice %115 {offsets = [0, 0], sizes = [8, 32], strides = [1, 1]} : vector<8x96xf32> to vector<8x32xf32>
    %120 = vector.extract_strided_slice %118 {offsets = [0, 0], sizes = [8, 32], strides = [1, 1]} : vector<8x96xf32> to vector<8x32xf32>
    %121 = arith.addf %119, %120 : vector<8x32xf32>
    %122 = arith.negf %121 : vector<8x32xf32>
    %123 = math.exp %122 : vector<8x32xf32>
    %cst_25 = arith.constant 1.000000e+00 : f32
    %124 = vector.broadcast %cst_25 : f32 to vector<8x32xf32>
    %125 = arith.addf %124, %123 : vector<8x32xf32>
    %126 = arith.divf %124, %125 : vector<8x32xf32>
    %127 = vector.extract_strided_slice %115 {offsets = [0, 32], sizes = [8, 32], strides = [1, 1]} : vector<8x96xf32> to vector<8x32xf32>
    %128 = vector.extract_strided_slice %118 {offsets = [0, 32], sizes = [8, 32], strides = [1, 1]} : vector<8x96xf32> to vector<8x32xf32>
    %129 = arith.addf %127, %128 : vector<8x32xf32>
    %130 = arith.negf %129 : vector<8x32xf32>
    %131 = math.exp %130 : vector<8x32xf32>
    %cst_26 = arith.constant 1.000000e+00 : f32
    %132 = vector.broadcast %cst_26 : f32 to vector<8x32xf32>
    %133 = arith.addf %132, %131 : vector<8x32xf32>
    %134 = arith.divf %132, %133 : vector<8x32xf32>
    %135 = vector.extract_strided_slice %115 {offsets = [0, 64], sizes = [8, 32], strides = [1, 1]} : vector<8x96xf32> to vector<8x32xf32>
    %136 = vector.extract_strided_slice %118 {offsets = [0, 64], sizes = [8, 32], strides = [1, 1]} : vector<8x96xf32> to vector<8x32xf32>
    %137 = arith.mulf %126, %136 : vector<8x32xf32>
    %138 = arith.addf %135, %137 : vector<8x32xf32>
    %139 = math.tanh %138 : vector<8x32xf32>
    %cst_27 = arith.constant 1.000000e+00 : f32
    %140 = vector.broadcast %cst_27 : f32 to vector<8x32xf32>
    %141 = arith.subf %140, %134 : vector<8x32xf32>
    %142 = arith.mulf %141, %139 : vector<8x32xf32>
    %143 = arith.mulf %134, %114 : vector<8x32xf32>
    %144 = arith.addf %142, %143 : vector<8x32xf32>
    %c3_i32 = arith.constant 3 : i32
    %145 = vector.broadcast %c3_i32 : i32 to vector<8x1xi32>
    %146 = arith.cmpi sgt, %8, %145 : vector<8x1xi32>
    %147 = vector.shape_cast %146 : vector<8x1xi1> to vector<8x1xi1>
    %148 = vector.broadcast %147 : vector<8x1xi1> to vector<8x32xi1>
    %149 = arith.select %148, %144, %114 : vector<8x32xi1>, vector<8x32xf32>
    %150 = vector.extract_strided_slice %5 {offsets = [32, 0], sizes = [8, 96], strides = [1, 1]} : vector<64x96xf32> to vector<8x96xf32>
    %cst_28 = arith.constant dense<0.000000e+00> : vector<8x96xf32>
    %151 = tpu.matmul %149, %6, %cst_28 {dimension_numbers = #tpu.dot_dimension_numbers<[1], [0], [0], [1], [0, 0, 1, 1], [], []>} : vector<8x32xf32>, vector<32x96xf32>, vector<8x96xf32> -> vector<8x96xf32>
    %152 = vector.broadcast %7 : vector<1x96xf32> to vector<8x96xf32>
    %153 = arith.addf %151, %152 : vector<8x96xf32>
    %154 = vector.extract_strided_slice %150 {offsets = [0, 0], sizes = [8, 32], strides = [1, 1]} : vector<8x96xf32> to vector<8x32xf32>
    %155 = vector.extract_strided_slice %153 {offsets = [0, 0], sizes = [8, 32], strides = [1, 1]} : vector<8x96xf32> to vector<8x32xf32>
    %156 = arith.addf %154, %155 : vector<8x32xf32>
    %157 = arith.negf %156 : vector<8x32xf32>
    %158 = math.exp %157 : vector<8x32xf32>
    %cst_29 = arith.constant 1.000000e+00 : f32
    %159 = vector.broadcast %cst_29 : f32 to vector<8x32xf32>
    %160 = arith.addf %159, %158 : vector<8x32xf32>
    %161 = arith.divf %159, %160 : vector<8x32xf32>
    %162 = vector.extract_strided_slice %150 {offsets = [0, 32], sizes = [8, 32], strides = [1, 1]} : vector<8x96xf32> to vector<8x32xf32>
    %163 = vector.extract_strided_slice %153 {offsets = [0, 32], sizes = [8, 32], strides = [1, 1]} : vector<8x96xf32> to vector<8x32xf32>
    %164 = arith.addf %162, %163 : vector<8x32xf32>
    %165 = arith.negf %164 : vector<8x32xf32>
    %166 = math.exp %165 : vector<8x32xf32>
    %cst_30 = arith.constant 1.000000e+00 : f32
    %167 = vector.broadcast %cst_30 : f32 to vector<8x32xf32>
    %168 = arith.addf %167, %166 : vector<8x32xf32>
    %169 = arith.divf %167, %168 : vector<8x32xf32>
    %170 = vector.extract_strided_slice %150 {offsets = [0, 64], sizes = [8, 32], strides = [1, 1]} : vector<8x96xf32> to vector<8x32xf32>
    %171 = vector.extract_strided_slice %153 {offsets = [0, 64], sizes = [8, 32], strides = [1, 1]} : vector<8x96xf32> to vector<8x32xf32>
    %172 = arith.mulf %161, %171 : vector<8x32xf32>
    %173 = arith.addf %170, %172 : vector<8x32xf32>
    %174 = math.tanh %173 : vector<8x32xf32>
    %cst_31 = arith.constant 1.000000e+00 : f32
    %175 = vector.broadcast %cst_31 : f32 to vector<8x32xf32>
    %176 = arith.subf %175, %169 : vector<8x32xf32>
    %177 = arith.mulf %176, %174 : vector<8x32xf32>
    %178 = arith.mulf %169, %149 : vector<8x32xf32>
    %179 = arith.addf %177, %178 : vector<8x32xf32>
    %c4_i32 = arith.constant 4 : i32
    %180 = vector.broadcast %c4_i32 : i32 to vector<8x1xi32>
    %181 = arith.cmpi sgt, %8, %180 : vector<8x1xi32>
    %182 = vector.shape_cast %181 : vector<8x1xi1> to vector<8x1xi1>
    %183 = vector.broadcast %182 : vector<8x1xi1> to vector<8x32xi1>
    %184 = arith.select %183, %179, %149 : vector<8x32xi1>, vector<8x32xf32>
    %185 = vector.extract_strided_slice %5 {offsets = [40, 0], sizes = [8, 96], strides = [1, 1]} : vector<64x96xf32> to vector<8x96xf32>
    %cst_32 = arith.constant dense<0.000000e+00> : vector<8x96xf32>
    %186 = tpu.matmul %184, %6, %cst_32 {dimension_numbers = #tpu.dot_dimension_numbers<[1], [0], [0], [1], [0, 0, 1, 1], [], []>} : vector<8x32xf32>, vector<32x96xf32>, vector<8x96xf32> -> vector<8x96xf32>
    %187 = vector.broadcast %7 : vector<1x96xf32> to vector<8x96xf32>
    %188 = arith.addf %186, %187 : vector<8x96xf32>
    %189 = vector.extract_strided_slice %185 {offsets = [0, 0], sizes = [8, 32], strides = [1, 1]} : vector<8x96xf32> to vector<8x32xf32>
    %190 = vector.extract_strided_slice %188 {offsets = [0, 0], sizes = [8, 32], strides = [1, 1]} : vector<8x96xf32> to vector<8x32xf32>
    %191 = arith.addf %189, %190 : vector<8x32xf32>
    %192 = arith.negf %191 : vector<8x32xf32>
    %193 = math.exp %192 : vector<8x32xf32>
    %cst_33 = arith.constant 1.000000e+00 : f32
    %194 = vector.broadcast %cst_33 : f32 to vector<8x32xf32>
    %195 = arith.addf %194, %193 : vector<8x32xf32>
    %196 = arith.divf %194, %195 : vector<8x32xf32>
    %197 = vector.extract_strided_slice %185 {offsets = [0, 32], sizes = [8, 32], strides = [1, 1]} : vector<8x96xf32> to vector<8x32xf32>
    %198 = vector.extract_strided_slice %188 {offsets = [0, 32], sizes = [8, 32], strides = [1, 1]} : vector<8x96xf32> to vector<8x32xf32>
    %199 = arith.addf %197, %198 : vector<8x32xf32>
    %200 = arith.negf %199 : vector<8x32xf32>
    %201 = math.exp %200 : vector<8x32xf32>
    %cst_34 = arith.constant 1.000000e+00 : f32
    %202 = vector.broadcast %cst_34 : f32 to vector<8x32xf32>
    %203 = arith.addf %202, %201 : vector<8x32xf32>
    %204 = arith.divf %202, %203 : vector<8x32xf32>
    %205 = vector.extract_strided_slice %185 {offsets = [0, 64], sizes = [8, 32], strides = [1, 1]} : vector<8x96xf32> to vector<8x32xf32>
    %206 = vector.extract_strided_slice %188 {offsets = [0, 64], sizes = [8, 32], strides = [1, 1]} : vector<8x96xf32> to vector<8x32xf32>
    %207 = arith.mulf %196, %206 : vector<8x32xf32>
    %208 = arith.addf %205, %207 : vector<8x32xf32>
    %209 = math.tanh %208 : vector<8x32xf32>
    %cst_35 = arith.constant 1.000000e+00 : f32
    %210 = vector.broadcast %cst_35 : f32 to vector<8x32xf32>
    %211 = arith.subf %210, %204 : vector<8x32xf32>
    %212 = arith.mulf %211, %209 : vector<8x32xf32>
    %213 = arith.mulf %204, %184 : vector<8x32xf32>
    %214 = arith.addf %212, %213 : vector<8x32xf32>
    %c5_i32 = arith.constant 5 : i32
    %215 = vector.broadcast %c5_i32 : i32 to vector<8x1xi32>
    %216 = arith.cmpi sgt, %8, %215 : vector<8x1xi32>
    %217 = vector.shape_cast %216 : vector<8x1xi1> to vector<8x1xi1>
    %218 = vector.broadcast %217 : vector<8x1xi1> to vector<8x32xi1>
    %219 = arith.select %218, %214, %184 : vector<8x32xi1>, vector<8x32xf32>
    %220 = vector.extract_strided_slice %5 {offsets = [48, 0], sizes = [8, 96], strides = [1, 1]} : vector<64x96xf32> to vector<8x96xf32>
    %cst_36 = arith.constant dense<0.000000e+00> : vector<8x96xf32>
    %221 = tpu.matmul %219, %6, %cst_36 {dimension_numbers = #tpu.dot_dimension_numbers<[1], [0], [0], [1], [0, 0, 1, 1], [], []>} : vector<8x32xf32>, vector<32x96xf32>, vector<8x96xf32> -> vector<8x96xf32>
    %222 = vector.broadcast %7 : vector<1x96xf32> to vector<8x96xf32>
    %223 = arith.addf %221, %222 : vector<8x96xf32>
    %224 = vector.extract_strided_slice %220 {offsets = [0, 0], sizes = [8, 32], strides = [1, 1]} : vector<8x96xf32> to vector<8x32xf32>
    %225 = vector.extract_strided_slice %223 {offsets = [0, 0], sizes = [8, 32], strides = [1, 1]} : vector<8x96xf32> to vector<8x32xf32>
    %226 = arith.addf %224, %225 : vector<8x32xf32>
    %227 = arith.negf %226 : vector<8x32xf32>
    %228 = math.exp %227 : vector<8x32xf32>
    %cst_37 = arith.constant 1.000000e+00 : f32
    %229 = vector.broadcast %cst_37 : f32 to vector<8x32xf32>
    %230 = arith.addf %229, %228 : vector<8x32xf32>
    %231 = arith.divf %229, %230 : vector<8x32xf32>
    %232 = vector.extract_strided_slice %220 {offsets = [0, 32], sizes = [8, 32], strides = [1, 1]} : vector<8x96xf32> to vector<8x32xf32>
    %233 = vector.extract_strided_slice %223 {offsets = [0, 32], sizes = [8, 32], strides = [1, 1]} : vector<8x96xf32> to vector<8x32xf32>
    %234 = arith.addf %232, %233 : vector<8x32xf32>
    %235 = arith.negf %234 : vector<8x32xf32>
    %236 = math.exp %235 : vector<8x32xf32>
    %cst_38 = arith.constant 1.000000e+00 : f32
    %237 = vector.broadcast %cst_38 : f32 to vector<8x32xf32>
    %238 = arith.addf %237, %236 : vector<8x32xf32>
    %239 = arith.divf %237, %238 : vector<8x32xf32>
    %240 = vector.extract_strided_slice %220 {offsets = [0, 64], sizes = [8, 32], strides = [1, 1]} : vector<8x96xf32> to vector<8x32xf32>
    %241 = vector.extract_strided_slice %223 {offsets = [0, 64], sizes = [8, 32], strides = [1, 1]} : vector<8x96xf32> to vector<8x32xf32>
    %242 = arith.mulf %231, %241 : vector<8x32xf32>
    %243 = arith.addf %240, %242 : vector<8x32xf32>
    %244 = math.tanh %243 : vector<8x32xf32>
    %cst_39 = arith.constant 1.000000e+00 : f32
    %245 = vector.broadcast %cst_39 : f32 to vector<8x32xf32>
    %246 = arith.subf %245, %239 : vector<8x32xf32>
    %247 = arith.mulf %246, %244 : vector<8x32xf32>
    %248 = arith.mulf %239, %219 : vector<8x32xf32>
    %249 = arith.addf %247, %248 : vector<8x32xf32>
    %c6_i32 = arith.constant 6 : i32
    %250 = vector.broadcast %c6_i32 : i32 to vector<8x1xi32>
    %251 = arith.cmpi sgt, %8, %250 : vector<8x1xi32>
    %252 = vector.shape_cast %251 : vector<8x1xi1> to vector<8x1xi1>
    %253 = vector.broadcast %252 : vector<8x1xi1> to vector<8x32xi1>
    %254 = arith.select %253, %249, %219 : vector<8x32xi1>, vector<8x32xf32>
    %255 = vector.extract_strided_slice %5 {offsets = [56, 0], sizes = [8, 96], strides = [1, 1]} : vector<64x96xf32> to vector<8x96xf32>
    %cst_40 = arith.constant dense<0.000000e+00> : vector<8x96xf32>
    %256 = tpu.matmul %254, %6, %cst_40 {dimension_numbers = #tpu.dot_dimension_numbers<[1], [0], [0], [1], [0, 0, 1, 1], [], []>} : vector<8x32xf32>, vector<32x96xf32>, vector<8x96xf32> -> vector<8x96xf32>
    %257 = vector.broadcast %7 : vector<1x96xf32> to vector<8x96xf32>
    %258 = arith.addf %256, %257 : vector<8x96xf32>
    %259 = vector.extract_strided_slice %255 {offsets = [0, 0], sizes = [8, 32], strides = [1, 1]} : vector<8x96xf32> to vector<8x32xf32>
    %260 = vector.extract_strided_slice %258 {offsets = [0, 0], sizes = [8, 32], strides = [1, 1]} : vector<8x96xf32> to vector<8x32xf32>
    %261 = arith.addf %259, %260 : vector<8x32xf32>
    %262 = arith.negf %261 : vector<8x32xf32>
    %263 = math.exp %262 : vector<8x32xf32>
    %cst_41 = arith.constant 1.000000e+00 : f32
    %264 = vector.broadcast %cst_41 : f32 to vector<8x32xf32>
    %265 = arith.addf %264, %263 : vector<8x32xf32>
    %266 = arith.divf %264, %265 : vector<8x32xf32>
    %267 = vector.extract_strided_slice %255 {offsets = [0, 32], sizes = [8, 32], strides = [1, 1]} : vector<8x96xf32> to vector<8x32xf32>
    %268 = vector.extract_strided_slice %258 {offsets = [0, 32], sizes = [8, 32], strides = [1, 1]} : vector<8x96xf32> to vector<8x32xf32>
    %269 = arith.addf %267, %268 : vector<8x32xf32>
    %270 = arith.negf %269 : vector<8x32xf32>
    %271 = math.exp %270 : vector<8x32xf32>
    %cst_42 = arith.constant 1.000000e+00 : f32
    %272 = vector.broadcast %cst_42 : f32 to vector<8x32xf32>
    %273 = arith.addf %272, %271 : vector<8x32xf32>
    %274 = arith.divf %272, %273 : vector<8x32xf32>
    %275 = vector.extract_strided_slice %255 {offsets = [0, 64], sizes = [8, 32], strides = [1, 1]} : vector<8x96xf32> to vector<8x32xf32>
    %276 = vector.extract_strided_slice %258 {offsets = [0, 64], sizes = [8, 32], strides = [1, 1]} : vector<8x96xf32> to vector<8x32xf32>
    %277 = arith.mulf %266, %276 : vector<8x32xf32>
    %278 = arith.addf %275, %277 : vector<8x32xf32>
    %279 = math.tanh %278 : vector<8x32xf32>
    %cst_43 = arith.constant 1.000000e+00 : f32
    %280 = vector.broadcast %cst_43 : f32 to vector<8x32xf32>
    %281 = arith.subf %280, %274 : vector<8x32xf32>
    %282 = arith.mulf %281, %279 : vector<8x32xf32>
    %283 = arith.mulf %274, %254 : vector<8x32xf32>
    %284 = arith.addf %282, %283 : vector<8x32xf32>
    %c7_i32 = arith.constant 7 : i32
    %285 = vector.broadcast %c7_i32 : i32 to vector<8x1xi32>
    %286 = arith.cmpi sgt, %8, %285 : vector<8x1xi32>
    %287 = vector.shape_cast %286 : vector<8x1xi1> to vector<8x1xi1>
    %288 = vector.broadcast %287 : vector<8x1xi1> to vector<8x32xi1>
    %289 = arith.select %288, %284, %254 : vector<8x32xi1>, vector<8x32xf32>
    %c0_44 = arith.constant 0 : index
    %c0_45 = arith.constant 0 : index
    %290 = vector.load %arg6[%c0_44, %c0_45] : memref<32x4xf32, #tpu.memory_space<vmem>>, vector<32x4xf32>
    %cst_46 = arith.constant dense<0.000000e+00> : vector<8x4xf32>
    %291 = tpu.matmul %289, %290, %cst_46 {dimension_numbers = #tpu.dot_dimension_numbers<[1], [0], [0], [1], [0, 0, 1, 1], [], []>} : vector<8x32xf32>, vector<32x4xf32>, vector<8x4xf32> -> vector<8x4xf32>
    %c0_47 = arith.constant 0 : index
    %c0_48 = arith.constant 0 : index
    %292 = vector.load %arg7[%c0_47, %c0_48] : memref<1x4xf32, #tpu.memory_space<vmem>>, vector<1x4xf32>
    %293 = vector.broadcast %292 : vector<1x4xf32> to vector<8x4xf32>
    %294 = arith.addf %291, %293 : vector<8x4xf32>
    %c0_49 = arith.constant 0 : index
    %c0_50 = arith.constant 0 : index
    %295 = vector.load %arg8[%c0_49, %c0_50] : memref<8x4xf32, #tpu.memory_space<vmem>>, vector<8x4xf32>
    tpu.vector_store %arg8[%c0_49, %c0_50], %294 {strides = array<i32>} : memref<8x4xf32, #tpu.memory_space<vmem>>, vector<8x4xf32>,
    return
  }
}

</mosaic_0001>

<llo_original>
// kernel: tpu_custom_call.1
$region0: #{tpu_custom_call.1}
  #allocation0 [shape = 'u32[]', space=smem, size = 0x4, offset = 0x4, fixed_abs, tag = 'smem constant byte address 0x4 - core index']
  #allocation1 [shape = 'u32[72,128]{1,0:T(1,128)}', space=vmem, size = 0x9000, scoped, tag = 'internal scratch']
  %s0 = inlined_call_operand.vmem [shape: f32[64,32], index: 0, kind: input, shape index: {}]
  %s1 = inlined_call_operand.vmem [shape: s32[8,1], index: 1, kind: input, shape index: {}]
  %s2 = inlined_call_operand.vmem [shape: f32[32,96], index: 2, kind: input, shape index: {}]
  %s3 = inlined_call_operand.vmem [shape: f32[32,96], index: 3, kind: input, shape index: {}]
  %s4 = inlined_call_operand.vmem [shape: f32[1,96], index: 4, kind: input, shape index: {}]
  %s5 = inlined_call_operand.vmem [shape: f32[1,96], index: 5, kind: input, shape index: {}]
  %s6 = inlined_call_operand.vmem [shape: f32[32,4], index: 6, kind: input, shape index: {}]
  %s7 = inlined_call_operand.vmem [shape: f32[1,4], index: 7, kind: input, shape index: {}]
  %s8 = inlined_call_operand.vmem [shape: f32[8,4], index: 8, kind: output, shape index: {}]
  %s9 = sld [smem:[#allocation0]]
  $region42: #{tpu_custom_call.1} parent=0
    _
  %s11 = ssub.s32 1, %s9
  %s12 = scalar_select 0, %s11, %s9
  // Predicated region
  $region2: #{tpu_custom_call.1} parent=0 // pred_check
    _
  $region3: #{tpu_custom_call.1} parent=0 // pred_check_branch
    %14 = sbr.rel (0) target = $region5
  $region4: #{tpu_custom_call.1} parent=0 // pred_region
    _
  $region5: #{tpu_custom_call.1} parent=0 // pred_fallthru
    _
  // Predicated region
  $region6: #{tpu_custom_call.1} parent=0 // pred_check
    _
  $region7: #{tpu_custom_call.1} parent=0 // pred_check_branch
    %16 = sbr.rel (0) target = $region9
  $region8: #{tpu_custom_call.1} parent=0 // pred_region
    _
  $region9: #{tpu_custom_call.1} parent=0 // pred_fallthru
    _
  // Predicated region
  $region10: #{tpu_custom_call.1} parent=0 // pred_check
    _
  $region11: #{tpu_custom_call.1} parent=0 // pred_check_branch
    %18 = sbr.rel (0) target = $region13
  $region12: #{tpu_custom_call.1} parent=0 // pred_region
    _
  $region13: #{tpu_custom_call.1} parent=0 // pred_fallthru
    _
  // Predicated region
  $region14: #{tpu_custom_call.1} parent=0 // pred_check
    _
  $region15: #{tpu_custom_call.1} parent=0 // pred_check_branch
    %20 = sbr.rel (0) target = $region17
  $region16: #{tpu_custom_call.1} parent=0 // pred_region
    _
  $region17: #{tpu_custom_call.1} parent=0 // pred_fallthru
    _
  // Predicated region
  $region18: #{tpu_custom_call.1} parent=0 // pred_check
    _
  $region19: #{tpu_custom_call.1} parent=0 // pred_check_branch
    %22 = sbr.rel (0) target = $region21
  $region20: #{tpu_custom_call.1} parent=0 // pred_region
    _
  $region21: #{tpu_custom_call.1} parent=0 // pred_fallthru
    _
  // Predicated region
  $region22: #{tpu_custom_call.1} parent=0 // pred_check
    _
  $region23: #{tpu_custom_call.1} parent=0 // pred_check_branch
    %24 = sbr.rel (0) target = $region25
  $region24: #{tpu_custom_call.1} parent=0 // pred_region
    _
  $region25: #{tpu_custom_call.1} parent=0 // pred_fallthru
    _
  // Predicated region
  $region26: #{tpu_custom_call.1} parent=0 // pred_check
    _
  $region27: #{tpu_custom_call.1} parent=0 // pred_check_branch
    %26 = sbr.rel (0) target = $region29
  $region28: #{tpu_custom_call.1} parent=0 // pred_region
    _
  $region29: #{tpu_custom_call.1} parent=0 // pred_fallthru
    _
  // Predicated region
  $region30: #{tpu_custom_call.1} parent=0 // pred_check
    _
  $region31: #{tpu_custom_call.1} parent=0 // pred_check_branch
    %28 = sbr.rel (0) target = $region33
  $region32: #{tpu_custom_call.1} parent=0 // pred_region
    _
  $region33: #{tpu_custom_call.1} parent=0 // pred_fallthru
    _
  %v29 = vld [vmem:[%s0] sm:$0xff]
  %v30 = vld [vmem:[%s0 + $0x8] sm:$0xff]
  %v31 = vld [vmem:[%s0 + $0x10] sm:$0xff]
  %v32 = vld [vmem:[%s0 + $0x18] sm:$0xff]
  %v33 = vld [vmem:[%s0 + $0x20] sm:$0xff]
  %v34 = vld [vmem:[%s0 + $0x28] sm:$0xff]
  %v35 = vld [vmem:[%s0 + $0x30] sm:$0xff]
  %v36 = vld [vmem:[%s0 + $0x38] sm:$0xff]
  %v37 = vld [vmem:[%s2] sm:$0xff]
  %v38 = vld [vmem:[%s2 + $0x8] sm:$0xff]
  %v39 = vld [vmem:[%s2 + $0x10] sm:$0xff]
  %v40 = vld [vmem:[%s2 + $0x18] sm:$0xff]
  %v41 = vld [vmem:[%s4] sm:$0x1]
  %v43 = vperm.slane %v41, 0
  %vm45 = vcmask 261120
  %v47 = vsel %vm45, %v29, 0
  %v50 = vsel %vm45, %v30, 0
  %v53 = vsel %vm45, %v31, 0
  %v56 = vsel %vm45, %v32, 0
  %v59 = vsel %vm45, %v33, 0
  %v62 = vsel %vm45, %v34, 0
  %v65 = vsel %vm45, %v35, 0
  %v68 = vsel %vm45, %v36, 0
  %70 = vmatpush.msra.mxu0 0.0
  %71 = vmatpush.msra.mxu0 0.0
  %72 = vmatpush.msra.mxu0 0.0
  %73 = vmatpush.msra.mxu0 0.0
  %74 = vmatpush.msra.mxu0 0.0
  %75 = vmatpush.msra.mxu0 0.0
  %76 = vmatpush.msra.mxu0 0.0
  %77 = vmatpush.msra.mxu0 0.0
  %78 = vmatpush.msra.mxu0 0.0
  %79 = vmatpush.msra.mxu0 0.0
  %80 = vmatpush.msra.mxu0 0.0
  %81 = vmatpush.msra.mxu0 0.0
  %82 = vmatpush.msra.mxu0 %v40
  %83 = vmatpush.msra.mxu0 %v39
  %84 = vmatpush.msra.mxu0 %v38
  %85 = vmatpush.msra.mxu0 %v37
  %86 = vmatmul.f32.gmra.mxu0 %v47
  %v87 = vpop.f32.mrf.mxu0
  %v88 = vadd.f32 %v43, %v87
  %89 = vmatmul.f32.gmra.mxu0 %v50
  %v90 = vpop.f32.mrf.mxu0
  %v91 = vadd.f32 %v43, %v90
  %92 = vmatmul.f32.gmra.mxu0 %v53
  %v93 = vpop.f32.mrf.mxu0
  %v94 = vadd.f32 %v43, %v93
  %95 = vmatmul.f32.gmra.mxu0 %v56
  %v96 = vpop.f32.mrf.mxu0
  %v97 = vadd.f32 %v43, %v96
  %98 = vmatmul.f32.gmra.mxu0 %v59
  %v99 = vpop.f32.mrf.mxu0
  %v100 = vadd.f32 %v43, %v99
  %101 = vmatmul.f32.gmra.mxu0 %v62
  %v102 = vpop.f32.mrf.mxu0
  %v103 = vadd.f32 %v43, %v102
  %104 = vmatmul.f32.gmra.mxu0 %v65
  %v105 = vpop.f32.mrf.mxu0
  %v106 = vadd.f32 %v43, %v105
  %107 = vmatmul.f32.gmra.mxu0 %v68
  %v108 = vpop.f32.mrf.mxu0
  %v109 = vadd.f32 %v43, %v108
  %110 = vdwg.mxu0
  %v111 = vld [vmem:[%s3] sm:$0xff]
  %v112 = vld [vmem:[%s3 + $0x8] sm:$0xff]
  %v113 = vld [vmem:[%s3 + $0x10] sm:$0xff]
  %v114 = vld [vmem:[%s3 + $0x18] sm:$0xff]
  %v115 = vld [vmem:[%s5] sm:$0x1]
  %v116 = vld [vmem:[%s1] sm:$0xff]
  %v118 = vperm.slane %v115, 0
  %v121 = vsel %vm45, 0.0, 0
  %123 = vmatpush.msra.mxu0 0.0
  %124 = vmatpush.msra.mxu0 0.0
  %125 = vmatpush.msra.mxu0 0.0
  %126 = vmatpush.msra.mxu0 0.0
  %127 = vmatpush.msra.mxu0 0.0
  %128 = vmatpush.msra.mxu0 0.0
  %129 = vmatpush.msra.mxu0 0.0
  %130 = vmatpush.msra.mxu0 0.0
  %131 = vmatpush.msra.mxu0 0.0
  %132 = vmatpush.msra.mxu0 0.0
  %133 = vmatpush.msra.mxu0 0.0
  %134 = vmatpush.msra.mxu0 0.0
  %135 = vmatpush.msra.mxu0 %v114
  %136 = vmatpush.msra.mxu0 %v113
  %137 = vmatpush.msra.mxu0 %v112
  %138 = vmatpush.msra.mxu0 %v111
  %139 = vmatmul.f32.gmra.mxu0 %v121
  %v140 = vpop.f32.mrf.mxu0
  %v141 = vadd.f32 %v118, %v140
  %142 = vdwg.mxu0
  %v143 = vadd.f32 %v88, %v141
  %v144 = vxor.u32 %v143, 2147483648
  %v145 = vmul.f32 %v144, 1.442695
  %v146 = vpow.pop %v145
  %v147 = vadd.f32 %v146, 1.0
  %v148 = vrcp.pop %v147
  %v149 = vmul.f32 %v147, %v148
  %v150 = vsub.f32 1.0, %v149
  %v151 = vmul.f32 %v148, %v150
  %v152 = vadd.f32 %v148, %v151
  %vm153 = vweird.f32 %v147
  %vm154 = vweird.f32 %v148
  %vm155 = vmor %vm153, %vm154
  %v156 = vsel %vm155, %v148, %v152
  %v157 = vand.u32 2147483647, %v147
  %vm158 = vcmp.eq.f32.partialorder %v157, 8.507059e+37
  %v159 = vand.u32 %v147, 2147483648
  %v160 = vor.u32 1.1754944e-38, %v159
  %v161 = vsel %vm158, %v160, %v156
  %v162 = vmul.f32 1.0, %v161
  %164 = vrot.lane.b32.xlu0 %v141, 64
  %v165 = vpop.permute.xlu0 %164
  %v167 = vmul.f32 %v162, %v165
  %169 = vrot.lane.b32.xlu0 %v167, 64
  %v170 = vpop.permute.xlu0 %169
  %v172 = vadd.f32 %v88, %v170
  %v173 = vtanh.pop %v172
  %v174 = vsub.f32 1.0, %v162
  %176 = vrot.lane.b32.xlu0 %v173, 96
  %v177 = vpop.permute.xlu0 %176
  %v179 = vmul.f32 %v174, %v177
  %v180 = vmul.f32 %v162, 0.0
  %v181 = vadd.f32 %v179, %v180
  %vm182 = vcmp.gt.s32.totalorder %v116, 0
  %v183 = vsel %vm182, 1, 0
  %184 = vset.pattern.permute.xlu0 0
  %185 = vperm.xlu0 %184, %v183
  %v186 = vpop.permute.xlu0 %185
  %vm187 = vcmp.eq.s32.totalorder %v186, 1
  %v188 = vsel %vm187, %v181, 0.0
  %190 = vrot.lane.b32.xlu0 %v188, 96
  %v191 = vpop.permute.xlu0 %190
  %v192 = vsel %vm45, %v191, 0
  %194 = vmatpush.msra.mxu0 0.0
  %195 = vmatpush.msra.mxu0 0.0
  %196 = vmatpush.msra.mxu0 0.0
  %197 = vmatpush.msra.mxu0 0.0
  %198 = vmatpush.msra.mxu0 0.0
  %199 = vmatpush.msra.mxu0 0.0
  %200 = vmatpush.msra.mxu0 0.0
  %201 = vmatpush.msra.mxu0 0.0
  %202 = vmatpush.msra.mxu0 0.0
  %203 = vmatpush.msra.mxu0 0.0
  %204 = vmatpush.msra.mxu0 0.0
  %205 = vmatpush.msra.mxu0 0.0
  %206 = vmatpush.msra.mxu0 %v114
  %207 = vmatpush.msra.mxu0 %v113
  %208 = vmatpush.msra.mxu0 %v112
  %209 = vmatpush.msra.mxu0 %v111
  %210 = vmatmul.f32.gmra.mxu0 %v192
  %v211 = vpop.f32.mrf.mxu0
  %v212 = vadd.f32 %v118, %v211
  %213 = vdwg.mxu0
  %v214 = vadd.f32 %v91, %v212
  %v215 = vxor.u32 %v214, 2147483648
  %v216 = vmul.f32 %v215, 1.442695
  %v217 = vpow.pop %v216
  %v218 = vadd.f32 %v217, 1.0
  %v219 = vrcp.pop %v218
  %v220 = vmul.f32 %v218, %v219
  %v221 = vsub.f32 1.0, %v220
  %v222 = vmul.f32 %v219, %v221
  %v223 = vadd.f32 %v219, %v222
  %vm224 = vweird.f32 %v218
  %vm225 = vweird.f32 %v219
  %vm226 = vmor %vm224, %vm225
  %v227 = vsel %vm226, %v219, %v223
  %v228 = vand.u32 2147483647, %v218
  %vm229 = vcmp.eq.f32.partialorder %v228, 8.507059e+37
  %v230 = vand.u32 %v218, 2147483648
  %v231 = vor.u32 1.1754944e-38, %v230
  %v232 = vsel %vm229, %v231, %v227
  %v233 = vmul.f32 1.0, %v232
  %235 = vrot.lane.b32.xlu0 %v212, 64
  %v236 = vpop.permute.xlu0 %235
  %v238 = vmul.f32 %v233, %v236
  %240 = vrot.lane.b32.xlu0 %v238, 64
  %v241 = vpop.permute.xlu0 %240
  %v243 = vadd.f32 %v91, %v241
  %v244 = vtanh.pop %v243
  %v245 = vsub.f32 1.0, %v233
  %247 = vrot.lane.b32.xlu0 %v244, 96
  %v248 = vpop.permute.xlu0 %247
  %v250 = vmul.f32 %v245, %v248
  %v251 = vmul.f32 %v233, %v188
  %v252 = vadd.f32 %v250, %v251
  %vm253 = vcmp.gt.s32.totalorder %v116, 1
  %v254 = vsel %vm253, 1, 0
  %255 = vset.pattern.permute.xlu0 0
  %256 = vperm.xlu0 %255, %v254
  %v257 = vpop.permute.xlu0 %256
  %vm258 = vcmp.eq.s32.totalorder %v257, 1
  %v259 = vsel %vm258, %v252, %v188
  %261 = vrot.lane.b32.xlu0 %v259, 96
  %v262 = vpop.permute.xlu0 %261
  %v263 = vsel %vm45, %v262, 0
  %265 = vmatpush.msra.mxu0 0.0
  %266 = vmatpush.msra.mxu0 0.0
  %267 = vmatpush.msra.mxu0 0.0
  %268 = vmatpush.msra.mxu0 0.0
  %269 = vmatpush.msra.mxu0 0.0
  %270 = vmatpush.msra.mxu0 0.0
  %271 = vmatpush.msra.mxu0 0.0
  %272 = vmatpush.msra.mxu0 0.0
  %273 = vmatpush.msra.mxu0 0.0
  %274 = vmatpush.msra.mxu0 0.0
  %275 = vmatpush.msra.mxu0 0.0
  %276 = vmatpush.msra.mxu0 0.0
  %277 = vmatpush.msra.mxu0 %v114
  %278 = vmatpush.msra.mxu0 %v113
  %279 = vmatpush.msra.mxu0 %v112
  %280 = vmatpush.msra.mxu0 %v111
  %281 = vmatmul.f32.gmra.mxu0 %v263
  %v282 = vpop.f32.mrf.mxu0
  %v283 = vadd.f32 %v118, %v282
  %284 = vdwg.mxu0
  %v285 = vadd.f32 %v94, %v283
  %v286 = vxor.u32 %v285, 2147483648
  %v287 = vmul.f32 %v286, 1.442695
  %v288 = vpow.pop %v287
  %v289 = vadd.f32 %v288, 1.0
  %v290 = vrcp.pop %v289
  %v291 = vmul.f32 %v289, %v290
  %v292 = vsub.f32 1.0, %v291
  %v293 = vmul.f32 %v290, %v292
  %v294 = vadd.f32 %v290, %v293
  %vm295 = vweird.f32 %v289
  %vm296 = vweird.f32 %v290
  %vm297 = vmor %vm295, %vm296
  %v298 = vsel %vm297, %v290, %v294
  %v299 = vand.u32 2147483647, %v289
  %vm300 = vcmp.eq.f32.partialorder %v299, 8.507059e+37
  %v301 = vand.u32 %v289, 2147483648
  %v302 = vor.u32 1.1754944e-38, %v301
  %v303 = vsel %vm300, %v302, %v298
  %v304 = vmul.f32 1.0, %v303
  %306 = vrot.lane.b32.xlu0 %v283, 64
  %v307 = vpop.permute.xlu0 %306
  %v309 = vmul.f32 %v304, %v307
  %311 = vrot.lane.b32.xlu0 %v309, 64
  %v312 = vpop.permute.xlu0 %311
  %v314 = vadd.f32 %v94, %v312
  %v315 = vtanh.pop %v314
  %v316 = vsub.f32 1.0, %v304
  %318 = vrot.lane.b32.xlu0 %v315, 96
  %v319 = vpop.permute.xlu0 %318
  %v321 = vmul.f32 %v316, %v319
  %v322 = vmul.f32 %v304, %v259
  %v323 = vadd.f32 %v321, %v322
  %vm324 = vcmp.gt.s32.totalorder %v116, 2
  %v325 = vsel %vm324, 1, 0
  %326 = vset.pattern.permute.xlu0 0
  %327 = vperm.xlu0 %326, %v325
  %v328 = vpop.permute.xlu0 %327
  %vm329 = vcmp.eq.s32.totalorder %v328, 1
  %v330 = vsel %vm329, %v323, %v259
  %332 = vrot.lane.b32.xlu0 %v330, 96
  %v333 = vpop.permute.xlu0 %332
  %v334 = vsel %vm45, %v333, 0
  %336 = vmatpush.msra.mxu0 0.0
  %337 = vmatpush.msra.mxu0 0.0
  %338 = vmatpush.msra.mxu0 0.0
  %339 = vmatpush.msra.mxu0 0.0
  %340 = vmatpush.msra.mxu0 0.0
  %341 = vmatpush.msra.mxu0 0.0
  %342 = vmatpush.msra.mxu0 0.0
  %343 = vmatpush.msra.mxu0 0.0
  %344 = vmatpush.msra.mxu0 0.0
  %345 = vmatpush.msra.mxu0 0.0
  %346 = vmatpush.msra.mxu0 0.0
  %347 = vmatpush.msra.mxu0 0.0
  %348 = vmatpush.msra.mxu0 %v114
  %349 = vmatpush.msra.mxu0 %v113
  %350 = vmatpush.msra.mxu0 %v112
  %351 = vmatpush.msra.mxu0 %v111
  %352 = vmatmul.f32.gmra.mxu0 %v334
  %v353 = vpop.f32.mrf.mxu0
  %v354 = vadd.f32 %v118, %v353
  %355 = vdwg.mxu0
  %v356 = vadd.f32 %v97, %v354
  %v357 = vxor.u32 %v356, 2147483648
  %v358 = vmul.f32 %v357, 1.442695
  %v359 = vpow.pop %v358
  %v360 = vadd.f32 %v359, 1.0
  %v361 = vrcp.pop %v360
  %v362 = vmul.f32 %v360, %v361
  %v363 = vsub.f32 1.0, %v362
  %v364 = vmul.f32 %v361, %v363
  %v365 = vadd.f32 %v361, %v364
  %vm366 = vweird.f32 %v360
  %vm367 = vweird.f32 %v361
  %vm368 = vmor %vm366, %vm367
  %v369 = vsel %vm368, %v361, %v365
  %v370 = vand.u32 2147483647, %v360
  %vm371 = vcmp.eq.f32.partialorder %v370, 8.507059e+37
  %v372 = vand.u32 %v360, 2147483648
  %v373 = vor.u32 1.1754944e-38, %v372
  %v374 = vsel %vm371, %v373, %v369
  %v375 = vmul.f32 1.0, %v374
  %377 = vrot.lane.b32.xlu0 %v354, 64
  %v378 = vpop.permute.xlu0 %377
  %v380 = vmul.f32 %v375, %v378
  %382 = vrot.lane.b32.xlu0 %v380, 64
  %v383 = vpop.permute.xlu0 %382
  %v385 = vadd.f32 %v97, %v383
  %v386 = vtanh.pop %v385
  %v387 = vsub.f32 1.0, %v375
  %389 = vrot.lane.b32.xlu0 %v386, 96
  %v390 = vpop.permute.xlu0 %389
  %v392 = vmul.f32 %v387, %v390
  %v393 = vmul.f32 %v375, %v330
  %v394 = vadd.f32 %v392, %v393
  %vm395 = vcmp.gt.s32.totalorder %v116, 3
  %v396 = vsel %vm395, 1, 0
  %397 = vset.pattern.permute.xlu0 0
  %398 = vperm.xlu0 %397, %v396
  %v399 = vpop.permute.xlu0 %398
  %vm400 = vcmp.eq.s32.totalorder %v399, 1
  %v401 = vsel %vm400, %v394, %v330
  %403 = vrot.lane.b32.xlu0 %v401, 96
  %v404 = vpop.permute.xlu0 %403
  %v405 = vsel %vm45, %v404, 0
  %407 = vmatpush.msra.mxu0 0.0
  %408 = vmatpush.msra.mxu0 0.0
  %409 = vmatpush.msra.mxu0 0.0
  %410 = vmatpush.msra.mxu0 0.0
  %411 = vmatpush.msra.mxu0 0.0
  %412 = vmatpush.msra.mxu0 0.0
  %413 = vmatpush.msra.mxu0 0.0
  %414 = vmatpush.msra.mxu0 0.0
  %415 = vmatpush.msra.mxu0 0.0
  %416 = vmatpush.msra.mxu0 0.0
  %417 = vmatpush.msra.mxu0 0.0
  %418 = vmatpush.msra.mxu0 0.0
  %419 = vmatpush.msra.mxu0 %v114
  %420 = vmatpush.msra.mxu0 %v113
  %421 = vmatpush.msra.mxu0 %v112
  %422 = vmatpush.msra.mxu0 %v111
  %423 = vmatmul.f32.gmra.mxu0 %v405
  %v424 = vpop.f32.mrf.mxu0
  %v425 = vadd.f32 %v118, %v424
  %426 = vdwg.mxu0
  %v427 = vadd.f32 %v100, %v425
  %v428 = vxor.u32 %v427, 2147483648
  %v429 = vmul.f32 %v428, 1.442695
  %v430 = vpow.pop %v429
  %v431 = vadd.f32 %v430, 1.0
  %v432 = vrcp.pop %v431
  %v433 = vmul.f32 %v431, %v432
  %v434 = vsub.f32 1.0, %v433
  %v435 = vmul.f32 %v432, %v434
  %v436 = vadd.f32 %v432, %v435
  %vm437 = vweird.f32 %v431
  %vm438 = vweird.f32 %v432
  %vm439 = vmor %vm437, %vm438
  %v440 = vsel %vm439, %v432, %v436
  %v441 = vand.u32 2147483647, %v431
  %vm442 = vcmp.eq.f32.partialorder %v441, 8.507059e+37
  %v443 = vand.u32 %v431, 2147483648
  %v444 = vor.u32 1.1754944e-38, %v443
  %v445 = vsel %vm442, %v444, %v440
  %v446 = vmul.f32 1.0, %v445
  %448 = vrot.lane.b32.xlu0 %v425, 64
  %v449 = vpop.permute.xlu0 %448
  %v451 = vmul.f32 %v446, %v449
  %453 = vrot.lane.b32.xlu0 %v451, 64
  %v454 = vpop.permute.xlu0 %453
  %v456 = vadd.f32 %v100, %v454
  %v457 = vtanh.pop %v456
  %v458 = vsub.f32 1.0, %v446
  %460 = vrot.lane.b32.xlu0 %v457, 96
  %v461 = vpop.permute.xlu0 %460
  %v463 = vmul.f32 %v458, %v461
  %v464 = vmul.f32 %v446, %v401
  %v465 = vadd.f32 %v463, %v464
  %vm466 = vcmp.gt.s32.totalorder %v116, 4
  %v467 = vsel %vm466, 1, 0
  %468 = vset.pattern.permute.xlu0 0
  %469 = vperm.xlu0 %468, %v467
  %v470 = vpop.permute.xlu0 %469
  %vm471 = vcmp.eq.s32.totalorder %v470, 1
  %v472 = vsel %vm471, %v465, %v401
  %474 = vrot.lane.b32.xlu0 %v472, 96
  %v475 = vpop.permute.xlu0 %474
  %v476 = vsel %vm45, %v475, 0
  %478 = vmatpush.msra.mxu0 0.0
  %479 = vmatpush.msra.mxu0 0.0
  %480 = vmatpush.msra.mxu0 0.0
  %481 = vmatpush.msra.mxu0 0.0
  %482 = vmatpush.msra.mxu0 0.0
  %483 = vmatpush.msra.mxu0 0.0
  %484 = vmatpush.msra.mxu0 0.0
  %485 = vmatpush.msra.mxu0 0.0
  %486 = vmatpush.msra.mxu0 0.0
  %487 = vmatpush.msra.mxu0 0.0
  %488 = vmatpush.msra.mxu0 0.0
  %489 = vmatpush.msra.mxu0 0.0
  %490 = vmatpush.msra.mxu0 %v114
  %491 = vmatpush.msra.mxu0 %v113
  %492 = vmatpush.msra.mxu0 %v112
  %493 = vmatpush.msra.mxu0 %v111
  %494 = vmatmul.f32.gmra.mxu0 %v476
  %v495 = vpop.f32.mrf.mxu0
  %v496 = vadd.f32 %v118, %v495
  %497 = vdwg.mxu0
  %v498 = vadd.f32 %v103, %v496
  %v499 = vxor.u32 %v498, 2147483648
  %v500 = vmul.f32 %v499, 1.442695
  %v501 = vpow.pop %v500
  %v502 = vadd.f32 %v501, 1.0
  %v503 = vrcp.pop %v502
  %v504 = vmul.f32 %v502, %v503
  %v505 = vsub.f32 1.0, %v504
  %v506 = vmul.f32 %v503, %v505
  %v507 = vadd.f32 %v503, %v506
  %vm508 = vweird.f32 %v502
  %vm509 = vweird.f32 %v503
  %vm510 = vmor %vm508, %vm509
  %v511 = vsel %vm510, %v503, %v507
  %v512 = vand.u32 2147483647, %v502
  %vm513 = vcmp.eq.f32.partialorder %v512, 8.507059e+37
  %v514 = vand.u32 %v502, 2147483648
  %v515 = vor.u32 1.1754944e-38, %v514
  %v516 = vsel %vm513, %v515, %v511
  %v517 = vmul.f32 1.0, %v516
  %519 = vrot.lane.b32.xlu0 %v496, 64
  %v520 = vpop.permute.xlu0 %519
  %v522 = vmul.f32 %v517, %v520
  %524 = vrot.lane.b32.xlu0 %v522, 64
  %v525 = vpop.permute.xlu0 %524
  %v527 = vadd.f32 %v103, %v525
  %v528 = vtanh.pop %v527
  %v529 = vsub.f32 1.0, %v517
  %531 = vrot.lane.b32.xlu0 %v528, 96
  %v532 = vpop.permute.xlu0 %531
  %v534 = vmul.f32 %v529, %v532
  %v535 = vmul.f32 %v517, %v472
  %v536 = vadd.f32 %v534, %v535
  %vm537 = vcmp.gt.s32.totalorder %v116, 5
  %v538 = vsel %vm537, 1, 0
  %539 = vset.pattern.permute.xlu0 0
  %540 = vperm.xlu0 %539, %v538
  %v541 = vpop.permute.xlu0 %540
  %vm542 = vcmp.eq.s32.totalorder %v541, 1
  %v543 = vsel %vm542, %v536, %v472
  %545 = vrot.lane.b32.xlu0 %v543, 96
  %v546 = vpop.permute.xlu0 %545
  %v547 = vsel %vm45, %v546, 0
  %549 = vmatpush.msra.mxu0 0.0
  %550 = vmatpush.msra.mxu0 0.0
  %551 = vmatpush.msra.mxu0 0.0
  %552 = vmatpush.msra.mxu0 0.0
  %553 = vmatpush.msra.mxu0 0.0
  %554 = vmatpush.msra.mxu0 0.0
  %555 = vmatpush.msra.mxu0 0.0
  %556 = vmatpush.msra.mxu0 0.0
  %557 = vmatpush.msra.mxu0 0.0
  %558 = vmatpush.msra.mxu0 0.0
  %559 = vmatpush.msra.mxu0 0.0
  %560 = vmatpush.msra.mxu0 0.0
  %561 = vmatpush.msra.mxu0 %v114
  %562 = vmatpush.msra.mxu0 %v113
  %563 = vmatpush.msra.mxu0 %v112
  %564 = vmatpush.msra.mxu0 %v111
  %565 = vmatmul.f32.gmra.mxu0 %v547
  %v566 = vpop.f32.mrf.mxu0
  %v567 = vadd.f32 %v118, %v566
  %568 = vdwg.mxu0
  %v569 = vadd.f32 %v106, %v567
  %v570 = vxor.u32 %v569, 2147483648
  %v571 = vmul.f32 %v570, 1.442695
  %v572 = vpow.pop %v571
  %v573 = vadd.f32 %v572, 1.0
  %v574 = vrcp.pop %v573
  %v575 = vmul.f32 %v573, %v574
  %v576 = vsub.f32 1.0, %v575
  %v577 = vmul.f32 %v574, %v576
  %v578 = vadd.f32 %v574, %v577
  %vm579 = vweird.f32 %v573
  %vm580 = vweird.f32 %v574
  %vm581 = vmor %vm579, %vm580
  %v582 = vsel %vm581, %v574, %v578
  %v583 = vand.u32 2147483647, %v573
  %vm584 = vcmp.eq.f32.partialorder %v583, 8.507059e+37
  %v585 = vand.u32 %v573, 2147483648
  %v586 = vor.u32 1.1754944e-38, %v585
  %v587 = vsel %vm584, %v586, %v582
  %v588 = vmul.f32 1.0, %v587
  %590 = vrot.lane.b32.xlu0 %v567, 64
  %v591 = vpop.permute.xlu0 %590
  %v593 = vmul.f32 %v588, %v591
  %595 = vrot.lane.b32.xlu0 %v593, 64
  %v596 = vpop.permute.xlu0 %595
  %v598 = vadd.f32 %v106, %v596
  %v599 = vtanh.pop %v598
  %v600 = vsub.f32 1.0, %v588
  %602 = vrot.lane.b32.xlu0 %v599, 96
  %v603 = vpop.permute.xlu0 %602
  %v605 = vmul.f32 %v600, %v603
  %v606 = vmul.f32 %v588, %v543
  %v607 = vadd.f32 %v605, %v606
  %vm608 = vcmp.gt.s32.totalorder %v116, 6
  %v609 = vsel %vm608, 1, 0
  %610 = vset.pattern.permute.xlu0 0
  %611 = vperm.xlu0 %610, %v609
  %v612 = vpop.permute.xlu0 %611
  %vm613 = vcmp.eq.s32.totalorder %v612, 1
  %v614 = vsel %vm613, %v607, %v543
  %616 = vrot.lane.b32.xlu0 %v614, 96
  %v617 = vpop.permute.xlu0 %616
  %v618 = vsel %vm45, %v617, 0
  %620 = vmatpush.msra.mxu0 0.0
  %621 = vmatpush.msra.mxu0 0.0
  %622 = vmatpush.msra.mxu0 0.0
  %623 = vmatpush.msra.mxu0 0.0
  %624 = vmatpush.msra.mxu0 0.0
  %625 = vmatpush.msra.mxu0 0.0
  %626 = vmatpush.msra.mxu0 0.0
  %627 = vmatpush.msra.mxu0 0.0
  %628 = vmatpush.msra.mxu0 0.0
  %629 = vmatpush.msra.mxu0 0.0
  %630 = vmatpush.msra.mxu0 0.0
  %631 = vmatpush.msra.mxu0 0.0
  %632 = vmatpush.msra.mxu0 %v114
  %633 = vmatpush.msra.mxu0 %v113
  %634 = vmatpush.msra.mxu0 %v112
  %635 = vmatpush.msra.mxu0 %v111
  %636 = vmatmul.f32.gmra.mxu0 %v618
  %v637 = vpop.f32.mrf.mxu0
  %v638 = vadd.f32 %v118, %v637
  %639 = vdwg.mxu0
  %v640 = vadd.f32 %v109, %v638
  %v641 = vxor.u32 %v640, 2147483648
  %v642 = vmul.f32 %v641, 1.442695
  %v643 = vpow.pop %v642
  %v644 = vadd.f32 %v643, 1.0
  %v645 = vrcp.pop %v644
  %v646 = vmul.f32 %v644, %v645
  %v647 = vsub.f32 1.0, %v646
  %v648 = vmul.f32 %v645, %v647
  %v649 = vadd.f32 %v645, %v648
  %vm650 = vweird.f32 %v644
  %vm651 = vweird.f32 %v645
  %vm652 = vmor %vm650, %vm651
  %v653 = vsel %vm652, %v645, %v649
  %v654 = vand.u32 2147483647, %v644
  %vm655 = vcmp.eq.f32.partialorder %v654, 8.507059e+37
  %v656 = vand.u32 %v644, 2147483648
  %v657 = vor.u32 1.1754944e-38, %v656
  %v658 = vsel %vm655, %v657, %v653
  %v659 = vmul.f32 1.0, %v658
  %661 = vrot.lane.b32.xlu0 %v638, 64
  %v662 = vpop.permute.xlu0 %661
  %v664 = vmul.f32 %v659, %v662
  %666 = vrot.lane.b32.xlu0 %v664, 64
  %v667 = vpop.permute.xlu0 %666
  %v669 = vadd.f32 %v109, %v667
  %v670 = vtanh.pop %v669
  %v671 = vsub.f32 1.0, %v659
  %673 = vrot.lane.b32.xlu0 %v670, 96
  %v674 = vpop.permute.xlu0 %673
  %v676 = vmul.f32 %v671, %v674
  %v677 = vmul.f32 %v659, %v614
  %v678 = vadd.f32 %v676, %v677
  %vm679 = vcmp.gt.s32.totalorder %v116, 7
  %v680 = vsel %vm679, 1, 0
  %681 = vset.pattern.permute.xlu0 0
  %682 = vperm.xlu0 %681, %v680
  %v683 = vpop.permute.xlu0 %682
  %vm684 = vcmp.eq.s32.totalorder %v683, 1
  %v685 = vsel %vm684, %v678, %v614
  %v686 = vld [vmem:[%s6] sm:$0xff]
  %v687 = vld [vmem:[%s6 + $0x8] sm:$0xff]
  %v688 = vld [vmem:[%s6 + $0x10] sm:$0xff]
  %v689 = vld [vmem:[%s6 + $0x18] sm:$0xff]
  %v690 = vld [vmem:[%s7] sm:$0x1]
  %v692 = vperm.slane %v690, 0
  %695 = vrot.lane.b32.xlu0 %v685, 96
  %v696 = vpop.permute.xlu0 %695
  %v697 = vsel %vm45, %v696, 0
  %699 = vmatpush.msra.mxu0 0.0
  %700 = vmatpush.msra.mxu0 0.0
  %701 = vmatpush.msra.mxu0 0.0
  %702 = vmatpush.msra.mxu0 0.0
  %703 = vmatpush.msra.mxu0 0.0
  %704 = vmatpush.msra.mxu0 0.0
  %705 = vmatpush.msra.mxu0 0.0
  %706 = vmatpush.msra.mxu0 0.0
  %707 = vmatpush.msra.mxu0 0.0
  %708 = vmatpush.msra.mxu0 0.0
  %709 = vmatpush.msra.mxu0 0.0
  %710 = vmatpush.msra.mxu0 0.0
  %711 = vmatpush.msra.mxu0 %v689
  %712 = vmatpush.msra.mxu0 %v688
  %713 = vmatpush.msra.mxu0 %v687
  %714 = vmatpush.msra.mxu0 %v686
  %715 = vmatmul.f32.gmra.mxu0 %v697
  %v716 = vpop.f32.mrf.mxu0
  %v717 = vadd.f32 %v692, %v716
  %718 = vdwg.mxu0
  %vm719 = vcmask 31744
  %720 = vst.msk [vmem:[%s8] sm:$0xff] %vm719, %v717
  // Predicated region
  $region34: #{tpu_custom_call.1} parent=0 // pred_check
    _
  $region35: #{tpu_custom_call.1} parent=0 // pred_check_branch
    %722 = sbr.rel (0) target = $region37
  $region36: #{tpu_custom_call.1} parent=0 // pred_region
    _
  $region37: #{tpu_custom_call.1} parent=0 // pred_fallthru
    _
  // Predicated region
  $region38: #{tpu_custom_call.1} parent=0 // pred_check
    _
  $region39: #{tpu_custom_call.1} parent=0 // pred_check_branch
    %724 = sbr.rel (0) target = $region41
  $region40: #{tpu_custom_call.1} parent=0 // pred_region
    _
  $region41: #{tpu_custom_call.1} parent=0 // pred_fallthru
    _

</llo_original>
